<compile_context>
chip_gen: v7x
topology: tpu7x:2x2x1
jax: 0.10.0
libtpu: 0.0.40
codegen_flags: <defaults>
</compile_context>

<pallas_src>
import functools

import jax
import jax.numpy as jnp
from jax.experimental import pallas as pl
from jax.experimental.pallas import tpu as pltpu


def _simam_kernel(x_ref, o_ref, *, inv_n, e_lambda, bf16_epilogue):
    # x_ref: (rows_tile, H*W) -- each row is one (b, c) channel's spatial map.
    x_in = x_ref[...]
    xf = x_in.astype(jnp.float32)
    hw = xf.shape[-1]

    # Reductions always in f32 (accuracy of mean / sum-of-squares).
    mu = jnp.sum(xf, axis=-1, keepdims=True) * (1.0 / hw)
    xm = xf - mu
    d = xm * xm                                   # (x - mean)^2
    s = jnp.sum(d, axis=-1, keepdims=True)        # sum over spatial

    # Reference math:  y = d / (4*(s/n + lambda)) + 0.5,  out = x * sigmoid(y)
    # Folded:          t = y/2 = d*r + 0.25 with r = 0.125/(s/n + lambda)
    #                  out = hx*tanh(t) + hx     with hx = 0.5*x
    # r is only (rows, 1): keep the reciprocal exact (negligible VALU cost).
    r = 0.125 * pl.reciprocal(s * inv_n + e_lambda, approx=False)

    if bf16_epilogue:
        # bf16 VALU/EUP epilogue (v6e/v7x): recompute d and the elementwise
        # tail in bf16 -- reductions above stayed in f32.
        xb = x_in.astype(jnp.bfloat16)
        xmb = xb - mu.astype(jnp.bfloat16)
        db = xmb * xmb
        t = db * r.astype(jnp.bfloat16) + 0.25
        hx = 0.5 * xb
        o_ref[...] = (hx * jnp.tanh(t) + hx).astype(o_ref.dtype)
    else:
        t = d * r + 0.25
        hx = 0.5 * xf
        o_ref[...] = (hx * jnp.tanh(t) + hx).astype(o_ref.dtype)


def _round_up(v, m):
    return -(-v // m) * m


def _round_down(v, m):
    return (v // m) * m


def _choose_tile_rows(bc, hw, itemsize, sub, vmem_cap):
    """Pick the per-grid-step row-tile size (multiple of `sub` or == bc)."""
    if bc <= sub:
        return bc  # single block covering all rows

    bytes_per_row = hw * itemsize

    # Target block size: ~4 MiB on 128-MiB-VMEM chips (v5e/v6e), ~2 MiB on
    # 64-MiB v7x -- large blocks amortize the ~0.35 us per-grid-step overhead.
    target_block_bytes = max(1 << 20, min(4 << 20, vmem_cap // 32))
    tr_bytes = max(sub, _round_down(target_block_bytes // max(bytes_per_row, 1), sub))

    # Aim for >= 8 grid steps (>= 4 per v7x TensorCore) so the DMA pipeline
    # reaches steady state; fall back to 4 / 2 steps for smaller B*C.
    tr_steps = bc
    for steps in (8, 4, 2):
        if bc >= steps * sub:
            tr_steps = max(sub, _round_down(bc // steps, sub))
            break

    tr = max(sub, min(tr_bytes, tr_steps, _round_up(bc, sub)))

    # Keep the per-step working set (double-buffered I/O blocks + ~3 f32
    # temporaries) comfortably inside VMEM; halve the tile if needed.
    def working_set(rows):
        return 4 * rows * hw * itemsize + 3 * rows * hw * 4

    budget = vmem_cap * 3 // 5
    while tr > sub and working_set(tr) > budget:
        tr = max(sub, _round_down(tr // 2, sub))

    # Prefer an even grid-step count: the grid axis is "parallel" and shards
    # across v7x's two TensorCores; an odd count idles one TC for a step.
    # Only shrink the tile modestly (never below half) to achieve this.
    steps = -(-bc // tr)
    if steps > 1 and steps % 2 == 1 and tr % sub == 0:
        cand = tr - sub
        while cand >= max(sub, tr // 2):
            if (-(-bc // cand)) % 2 == 0:
                tr = cand
                break
            cand -= sub

    return tr


def simam(x, e_lambda=1e-4, bf16_epilogue=None):
    """SimAM forward pass. x: (B, C, H, W) array."""
    b, c, h, w = x.shape
    # Matches the PyTorch module: n = H*W - 1 (degenerate for H*W == 1).
    n = float(h * w - 1)
    inv_n = (1.0 / n) if n > 0.0 else float("inf")

    bc = b * c
    hw = h * w
    x2d = x.reshape(bc, hw)

    itemsize = jnp.dtype(x.dtype).itemsize
    # Dtype-native sublane multiple: 8 for f32, 16 for bf16, 32 for int8/fp8.
    sub = max(8, 32 // max(itemsize, 1))

    try:
        vmem_cap = int(pltpu.get_tpu_info().vmem_capacity_bytes)
    except Exception:
        vmem_cap = 64 * 1024 * 1024  # conservative (v7x per-TensorCore VMEM)

    tr = _choose_tile_rows(bc, hw, itemsize, sub, vmem_cap)
    # cdiv grid: a partial last block (bc not a multiple of tr) is handled by
    # Pallas; rows are computed independently, so padded/stale rows never
    # contaminate valid rows.
    grid = (pl.cdiv(bc, tr),)

    # VMEM budget: in + out double-buffered in the I/O dtype plus ~3 f32
    # temporaries, +25% headroom, capped at 90% of physical VMEM.
    needed = 4 * tr * hw * itemsize + 3 * tr * hw * 4
    vmem_limit = int(min(max(needed + needed // 4 + (2 << 20), 32 << 20),
                         vmem_cap * 9 // 10))

    if bf16_epilogue is None:
        # Auto: bf16 epilogue for bf16 inputs (v6e/v7x have bf16 VALU/EUP).
        # On v5e, pass bf16_epilogue=False -- it is memory-bound there anyway.
        bf16_epilogue = (x.dtype == jnp.bfloat16)

    kernel = functools.partial(
        _simam_kernel,
        inv_n=inv_n,
        e_lambda=float(e_lambda),
        bf16_epilogue=bool(bf16_epilogue),
    )

    out2d = pl.pallas_call(
        kernel,
        out_shape=jax.ShapeDtypeStruct((bc, hw), x.dtype),
        grid_spec=pltpu.PrefetchScalarGridSpec(
            num_scalar_prefetch=0,
            grid=grid,
            in_specs=[pl.BlockSpec((tr, hw), lambda i: (i, 0))],
            out_specs=pl.BlockSpec((tr, hw), lambda i: (i, 0)),
        ),
        compiler_params=pltpu.CompilerParams(
            dimension_semantics=("parallel",),
            vmem_limit_bytes=vmem_limit,
        ),
    )(x2d)

    return out2d.reshape(b, c, h, w)


def simam_reference(x, e_lambda=1e-4):
    b, c, h, w = x.shape
    n = w * h - 1
    mu = jnp.mean(x, axis=(2, 3), keepdims=True)
    d = (x - mu) ** 2
    s = jnp.sum(d, axis=(2, 3), keepdims=True)
    y = d / (4.0 * (s / n + e_lambda)) + 0.5
    return x * jax.nn.sigmoid(y)


if __name__ == "__main__":
    key = jax.random.PRNGKey(0)

    # Primary small test (matches the module's implied shape).
    x = jax.random.normal(key, (2, 4, 16, 16), dtype=jnp.float32)
    out = jax.block_until_ready(simam(x))
    ref = simam_reference(x)
    assert out.shape == x.shape
    assert jnp.allclose(out, ref, atol=1e-5, rtol=1e-5), "mismatch vs reference"

    # Multi-block grid path (grid >= 2, evenly divisible rows).
    k1, k2, k3 = jax.random.split(key, 3)
    x2 = jax.random.normal(k1, (4, 8, 32, 32), dtype=jnp.float32)
    out2 = jax.block_until_ready(simam(x2))
    assert jnp.allclose(out2, simam_reference(x2), atol=1e-5, rtol=1e-5)

    # Ragged-rows path (bc not a multiple of 8 -> full-row single block).
    x3 = jax.random.normal(k2, (2, 5, 16, 16), dtype=jnp.float32)
    out3 = jax.block_until_ready(simam(x3))
    assert jnp.allclose(out3, simam_reference(x3), atol=1e-5, rtol=1e-5)

    # bf16 input: f32 reductions + bf16 epilogue (loose tolerance, bf16 math).
    xb = jax.random.normal(k3, (2, 16, 16, 16), dtype=jnp.float32).astype(jnp.bfloat16)
    outb = jax.block_until_ready(simam(xb))
    refb = simam_reference(xb.astype(jnp.float32))
    assert outb.shape == xb.shape
    assert jnp.allclose(outb.astype(jnp.float32), refb, atol=8e-2, rtol=8e-2)

    print("KERNEL_OK")
</pallas_src>

<mosaic_0001>
module attributes {stable_mosaic.version = 11 : i64} {
  func.func @_simam_kernel(%arg0: i32, %arg1: memref<8x256xf32, #tpu.memory_space<vmem>>, %arg2: memref<8x256xf32, #tpu.memory_space<vmem>>) attributes {dimension_semantics = [#tpu.dimension_semantics<parallel>], iteration_bounds = array<i64: 1>, scalar_prefetch = 0 : i64, scratch_operands = 0 : i64, tpu.core_type = #tpu.core_type<tc>, window_params = [{transform_indices = @transform_0, window_bounds = array<i64: 8, 256>}, {transform_indices = @transform_1, window_bounds = array<i64: 8, 256>}]} {
    %c0 = arith.constant 0 : index
    %c0_0 = arith.constant 0 : index
    %0 = vector.load %arg1[%c0, %c0_0] : memref<8x256xf32, #tpu.memory_space<vmem>>, vector<8x256xf32>
    %cst = arith.constant dense<0.000000e+00> : vector<8xf32>
    %1 = vector.multi_reduction <add>, %0, %cst [1] : vector<8x256xf32> to vector<8xf32>
    %2 = vector.shape_cast %1 : vector<8xf32> to vector<8x1xf32>
    %cst_1 = arith.constant 3.906250e-03 : f32
    %3 = vector.broadcast %cst_1 : f32 to vector<8x1xf32>
    %4 = arith.mulf %2, %3 : vector<8x1xf32>
    %5 = vector.broadcast %4 : vector<8x1xf32> to vector<8x256xf32>
    %6 = arith.subf %0, %5 : vector<8x256xf32>
    %7 = arith.mulf %6, %6 : vector<8x256xf32>
    %cst_2 = arith.constant dense<0.000000e+00> : vector<8xf32>
    %8 = vector.multi_reduction <add>, %7, %cst_2 [1] : vector<8x256xf32> to vector<8xf32>
    %9 = vector.shape_cast %8 : vector<8xf32> to vector<8x1xf32>
    %cst_3 = arith.constant 0.00392156886 : f32
    %10 = vector.broadcast %cst_3 : f32 to vector<8x1xf32>
    %11 = arith.mulf %9, %10 : vector<8x1xf32>
    %cst_4 = arith.constant 9.99999974E-5 : f32
    %12 = vector.broadcast %cst_4 : f32 to vector<8x1xf32>
    %13 = arith.addf %11, %12 : vector<8x1xf32>
    %14 = tpu.reciprocal %13 : vector<8x1xf32> -> vector<8x1xf32>
    %cst_5 = arith.constant 1.250000e-01 : f32
    %15 = vector.broadcast %cst_5 : f32 to vector<8x1xf32>
    %16 = arith.mulf %15, %14 : vector<8x1xf32>
    %17 = vector.broadcast %16 : vector<8x1xf32> to vector<8x256xf32>
    %18 = arith.mulf %7, %17 : vector<8x256xf32>
    %cst_6 = arith.constant 2.500000e-01 : f32
    %19 = vector.broadcast %cst_6 : f32 to vector<8x256xf32>
    %20 = arith.addf %18, %19 : vector<8x256xf32>
    %cst_7 = arith.constant 5.000000e-01 : f32
    %21 = vector.broadcast %cst_7 : f32 to vector<8x256xf32>
    %22 = arith.mulf %21, %0 : vector<8x256xf32>
    %23 = math.tanh %20 : vector<8x256xf32>
    %24 = arith.mulf %22, %23 : vector<8x256xf32>
    %25 = arith.addf %24, %22 : vector<8x256xf32>
    %c0_8 = arith.constant 0 : index
    %c0_9 = arith.constant 0 : index
    %26 = vector.load %arg2[%c0_8, %c0_9] : memref<8x256xf32, #tpu.memory_space<vmem>>, vector<8x256xf32>
    tpu.vector_store %arg2[%c0_8, %c0_9], %25 {strides = array<i32>} : memref<8x256xf32, #tpu.memory_space<vmem>>, vector<8x256xf32>,
    return
  }
  func.func @transform_0(%arg0: i32) -> (i32, i32) {
    %c0_i32 = arith.constant 0 : i32
    %c0_i32_0 = arith.constant 0 : i32
    return %arg0, %c0_i32 : i32, i32
  }
  func.func @transform_1(%arg0: i32) -> (i32, i32) {
    %c0_i32 = arith.constant 0 : i32
    %c0_i32_0 = arith.constant 0 : i32
    return %arg0, %c0_i32 : i32, i32
  }
}

</mosaic_0001>

<llo_original>
// kernel: tpu_custom_call.1
$region0: #{tpu_custom_call.1}
  #allocation0 [shape = 'u32[]', space=smem, size = 0x4, offset = 0x4, fixed_abs, tag = 'smem constant byte address 0x4 - core index']
  #allocation1 [shape = 'u32[144,128]{1,0:T(1,128)}', space=vmem, size = 0x12000, scoped, tag = 'internal scratch']
  %s0 = inlined_call_operand.hbm [shape: f32[8,256], index: 0, kind: input, shape index: {}]
  %s1 = inlined_call_operand.hbm [shape: f32[8,256], index: 1, kind: output, shape index: {}]
  %s2 = sld [smem:[#allocation0]]
  $region18: #{tpu_custom_call.1} parent=0
    _
  %s4 = ssub.s32 1, %s2
  %s5 = scalar_select 0, %s4, %s2
  $region1: #{tpu_custom_call.1} parent=0
    #allocation2 [shape = 'u8[8192]{0}', space=vmem, size = 0x2000, scoped, tag = 'input window, operand 0, single buffered']
    #allocation3 [shape = 's32[1]{0}', space=sflag, size = 0x4, scoped, tag = 'scoped memory for tpu_custom_call.1']
    #allocation4 [shape = 's32[1]{0}', space=sflag, size = 0x4, scoped, tag = 'scoped memory for tpu_custom_call.1']
    #allocation5 [shape = 'u8[8192]{0}', space=vmem, size = 0x2000, scoped, tag = 'output window, operand 0, single buffered']
    %6 = vsyncpa [#allocation3], 0
    %7 = vsyncpa [#allocation4], 0
    // Predicated region
    $region2: #{tpu_custom_call.1} parent=1 // pred_check
      _
    $region3: #{tpu_custom_call.1} parent=1 // pred_check_branch
      %9 = sbr.rel (0) target = $region5
    $region4: #{tpu_custom_call.1} parent=1 // pred_region
      %s11 = ssub.s32 256, 256
      %12 = vsyncadd [#allocation3], %s11
      %s14 = sshll.u32 [#allocation2], 4
      %s15 = int_to_ptr.vmem [resolvable:$true] %s14
      %17 = dma.hbm_to_vmem [thread:$0]  %s0, 256, %s15, [#allocation3]
    $region5: #{tpu_custom_call.1} parent=1 // pred_fallthru
      _
    // Predicated region
    $region6: #{tpu_custom_call.1} parent=1 // pred_check
      _
    $region7: #{tpu_custom_call.1} parent=1 // pred_check_branch
      %19 = sbr.rel (0) target = $region9
    $region8: #{tpu_custom_call.1} parent=1 // pred_region
      %20 = dma.done [#allocation3], 256
    $region9: #{tpu_custom_call.1} parent=1 // pred_fallthru
      _
    %v21 = vld [vmem:[#allocation2] sm:$0xff]
    %v22 = vld [vmem:[#allocation2 + $0x8] sm:$0xff]
    %v23 = vadd.f32 %v21, %v22
    %24 = vadd.xlane.f32.xlu0 %v23
    %v25 = vpop.xlane.xlu0 %24
    %v26 = vmul.f32 %v25, 0.00390625
    %v27 = vsub.f32 %v21, %v26
    %v28 = vsub.f32 %v22, %v26
    %v29 = vmul.f32 %v27, %v27
    %v30 = vmul.f32 %v28, %v28
    %v31 = vadd.f32 %v29, %v30
    %32 = vadd.xlane.f32.xlu0 %v31
    %v33 = vpop.xlane.xlu0 %32
    %v34 = vmul.f32 %v33, 0.003921569
    %v35 = vadd.f32 %v34, 0.0001
    %v36 = vrcp.pop %v35
    %v37 = vmul.f32 %v36, 0.125
    %v38 = vmul.f32 %v29, %v37
    %v39 = vmul.f32 %v30, %v37
    %v40 = vadd.f32 %v38, 0.25
    %v41 = vadd.f32 %v39, 0.25
    %v42 = vmul.f32 %v21, 0.5
    %v43 = vmul.f32 %v22, 0.5
    %v44 = vtanh.pop %v40
    %v45 = vtanh.pop %v41
    %v46 = vmul.f32 %v42, %v44
    %v47 = vmul.f32 %v43, %v45
    %v48 = vadd.f32 %v46, %v42
    %v49 = vadd.f32 %v47, %v43
    %50 = vst [vmem:[#allocation5] sm:$0xff] %v48
    %51 = vst [vmem:[#allocation5 + $0x8] sm:$0xff] %v49
    // Predicated region
    $region10: #{tpu_custom_call.1} parent=1 // pred_check
      _
    $region11: #{tpu_custom_call.1} parent=1 // pred_check_branch
      %53 = sbr.rel (0) target = $region13
    $region12: #{tpu_custom_call.1} parent=1 // pred_region
      %s55 = ssub.s32 256, 256
      %56 = vsyncadd [#allocation4], %s55
      %s58 = sshll.u32 [#allocation5], 4
      %s59 = int_to_ptr.vmem [resolvable:$true] %s58
      %61 = dma.vmem_to_hbm [thread:$0]  %s59, 256, %s1, [#allocation4]
    $region13: #{tpu_custom_call.1} parent=1 // pred_fallthru
      _
    // Predicated region
    $region14: #{tpu_custom_call.1} parent=1 // pred_check
      _
    $region15: #{tpu_custom_call.1} parent=1 // pred_check_branch
      %63 = sbr.rel (0) target = $region17
    $region16: #{tpu_custom_call.1} parent=1 // pred_region
      %64 = dma.done [#allocation4], 256
    $region17: #{tpu_custom_call.1} parent=1 // pred_fallthru
      _
    %65 = vsyncpa [#allocation3], 1
    %66 = vsyncpa [#allocation4], 1

</llo_original>
